<compile_context>
chip_gen: v6e
topology: v6e:2x2x1
jax: 0.10.0
libtpu: 0.0.40
codegen_flags: <defaults>
</compile_context>

<pallas_src>
import jax
import jax.numpy as jnp
from jax.experimental import pallas as pl
from jax.experimental.pallas import tpu as pltpu


def mlp_kernel(x_ref, w1_ref, b1_ref, w2_ref, b2_ref, w3_ref, b3_ref, o_ref):
    x = x_ref[...]                                                       # (TB, 6) f32

    # fc1 (+ folded BN1) -> relu        (dropout = identity at inference)
    h = jnp.dot(x, w1_ref[...], preferred_element_type=jnp.float32) + b1_ref[...]
    h = jnp.maximum(h, 0.0)                                              # (TB, 128)

    # fc2 (+ folded BN2) -> relu
    h = jnp.dot(h, w2_ref[...], preferred_element_type=jnp.float32) + b2_ref[...]
    h = jnp.maximum(h, 0.0)                                              # (TB, 32)

    # fc3 reduced to the 2-class logit difference, computed batch-in-lanes:
    # transpose (TB,32)->(32,TB) on the XLU (idle), then d = w3d @ h^T -> (1, TB).
    ht = h.T                                                             # (32, TB)
    d = jnp.dot(w3_ref[...], ht, preferred_element_type=jnp.float32) + b3_ref[...]

    # log_softmax over 2 classes via stable softplus of the logit difference:
    #   out[0] = -softplus(d),  out[1] = d - softplus(d)
    sp = jnp.maximum(d, 0.0) + jnp.log1p(jnp.exp(-jnp.abs(d)))           # (1, TB)

    cls = jax.lax.broadcasted_iota(jnp.int32, o_ref.shape, 0)            # (2, TB)
    o_ref[...] = jnp.where(cls == 0, -sp, d - sp)                        # lane-dense store


def _round_up(v, m):
    return ((v + m - 1) // m) * m


def neural_network_forward(x, params, tb=4096):
    """x: (B, 6) float32 -> (B, 2) log-probabilities (inference mode)."""
    (w1, b1, s1, t1, w2, b2, s2, t2, w3, b3) = params

    # --- Fold BatchNorm (running stats) exactly into the linear layers. ---
    w1f = w1 * s1                              # (6, 128)
    b1f = b1 * s1 + t1                         # (1, 128)
    w2f = w2 * s2                              # (128, 32)
    b2f = b2 * s2 + t2                         # (1, 32)
    # --- 2-class head: only the logit difference matters for log_softmax. ---
    w3d = (w3[:, 1:2] - w3[:, 0:1]).T          # (1, 32)
    b3d = (b3[:, 1:2] - b3[:, 0:1])            # (1, 1)

    B, F = x.shape

    if B <= tb:
        # Single full block (block == full array dims, no alignment constraints).
        tb_eff = B
    else:
        # Multi-tile: lane dim of the (2, B) output block must be a multiple of
        # 128; keep >= 2 tiles so a v7x megacore can split the parallel axis.
        tb_eff = min(_round_up(tb, 128), _round_up(pl.cdiv(B, 2), 128))
    n_tiles = pl.cdiv(B, tb_eff)

    const = lambda a: pl.BlockSpec(a.shape, lambda i: (0, 0))  # VMEM-resident params

    cost = pl.CostEstimate(
        flops=2 * B * (F * 128 + 128 * 32 + 32),
        transcendentals=2 * B,
        bytes_accessed=B * (F * 4 + 2 * 4) + 20_000,
    )

    out_t = pl.pallas_call(
        mlp_kernel,
        out_shape=jax.ShapeDtypeStruct((2, B), jnp.float32),
        grid=(n_tiles,),
        in_specs=[
            pl.BlockSpec((tb_eff, F), lambda i: (i, 0)),       # x: streamed per batch tile
            const(w1f), const(b1f),
            const(w2f), const(b2f),
            const(w3d), const(b3d),
        ],
        out_specs=pl.BlockSpec((2, tb_eff), lambda i: (0, i)),  # lane-dense (2, B)
        compiler_params=pltpu.CompilerParams(
            dimension_semantics=("parallel",),
            vmem_limit_bytes=32 << 20,
        ),
        cost_estimate=cost,
    )(x, w1f, b1f, w2f, b2f, w3d, b3d)

    return out_t.T                                              # (B, 2)


def init_params(key):
    """Deterministic synthetic parameters matching the PyTorch module shapes."""
    ks = jax.random.split(key, 8)
    eps = 1e-5

    def linear(kw, kb, fan_in, fan_out):
        bound = 1.0 / jnp.sqrt(fan_in)
        w = jax.random.uniform(kw, (fan_in, fan_out), jnp.float32, -bound, bound)
        b = jax.random.uniform(kb, (1, fan_out), jnp.float32, -bound, bound)
        return w, b

    w1, b1 = linear(ks[0], ks[1], 6, 128)
    w2, b2 = linear(ks[2], ks[3], 128, 32)
    w3, b3 = linear(ks[4], ks[5], 32, 2)

    def bn_fold(kgamma, n):
        # BatchNorm1d defaults: gamma=1, beta=0, running_mean=0, running_var=1
        # (perturb gamma slightly so the BN path is non-trivial, still deterministic)
        gamma = 1.0 + 0.01 * jax.random.normal(kgamma, (1, n), jnp.float32)
        beta = jnp.zeros((1, n), jnp.float32)
        running_mean = jnp.zeros((1, n), jnp.float32)
        running_var = jnp.ones((1, n), jnp.float32)
        scale = gamma / jnp.sqrt(running_var + eps)
        shift = beta - running_mean * scale
        return scale, shift

    s1, t1 = bn_fold(ks[6], 128)
    s2, t2 = bn_fold(ks[7], 32)
    return (w1, b1, s1, t1, w2, b2, s2, t2, w3, b3)


def _reference(x, params):
    """Pure-JAX f32 reference of the PyTorch forward (eval mode)."""
    (w1, b1, s1, t1, w2, b2, s2, t2, w3, b3) = params
    h = jnp.maximum((x @ w1 + b1) * s1 + t1, 0.0)
    h = jnp.maximum((h @ w2 + b2) * s2 + t2, 0.0)
    logits = h @ w3 + b3
    return jax.nn.log_softmax(logits, axis=1)


if __name__ == "__main__":
    key = jax.random.PRNGKey(0)
    k_x, k_p = jax.random.split(key)

    B = 8
    x = jax.random.normal(k_x, (B, 6), jnp.float32)
    params = init_params(k_p)

    out = neural_network_forward(x, params)
    out = jax.block_until_ready(out)

    assert out.shape == (B, 2)
    # log_softmax rows sum to 1 in probability space
    assert jnp.allclose(jnp.sum(jnp.exp(out), axis=1), 1.0, atol=1e-5)
    # match the f32 reference forward
    ref = _reference(x, params)
    assert jnp.allclose(out, ref, atol=1e-4, rtol=1e-4)
    print("KERNEL_OK")
</pallas_src>

<mosaic_0001>
module attributes {stable_mosaic.version = 11 : i64} {
  func.func @mlp_kernel(%arg0: i32, %arg1: memref<8x6xf32, #tpu.memory_space<vmem>>, %arg2: memref<6x128xf32, #tpu.memory_space<vmem>>, %arg3: memref<1x128xf32, #tpu.memory_space<vmem>>, %arg4: memref<128x32xf32, #tpu.memory_space<vmem>>, %arg5: memref<1x32xf32, #tpu.memory_space<vmem>>, %arg6: memref<1x32xf32, #tpu.memory_space<vmem>>, %arg7: memref<1x1xf32, #tpu.memory_space<vmem>>, %arg8: memref<2x8xf32, #tpu.memory_space<vmem>>) attributes {dimension_semantics = [#tpu.dimension_semantics<parallel>], iteration_bounds = array<i64: 1>, scalar_prefetch = 0 : i64, scratch_operands = 0 : i64, tpu.core_type = #tpu.core_type<tc>, window_params = [{transform_indices = @transform_0, window_bounds = array<i64: 8, 6>}, {pipeline_mode = #tpu.pipeline_mode<synchronous>, transform_indices = @transform_1, window_bounds = array<i64: 6, 128>}, {pipeline_mode = #tpu.pipeline_mode<synchronous>, transform_indices = @transform_2, window_bounds = array<i64: 1, 128>}, {pipeline_mode = #tpu.pipeline_mode<synchronous>, transform_indices = @transform_3, window_bounds = array<i64: 128, 32>}, {pipeline_mode = #tpu.pipeline_mode<synchronous>, transform_indices = @transform_4, window_bounds = array<i64: 1, 32>}, {pipeline_mode = #tpu.pipeline_mode<synchronous>, transform_indices = @transform_5, window_bounds = array<i64: 1, 32>}, {pipeline_mode = #tpu.pipeline_mode<synchronous>, transform_indices = @transform_6, window_bounds = array<i64: 1, 1>}, {transform_indices = @transform_7, window_bounds = array<i64: 2, 8>}]} {
    %c0 = arith.constant 0 : index
    %c0_0 = arith.constant 0 : index
    %0 = vector.load %arg1[%c0, %c0_0] : memref<8x6xf32, #tpu.memory_space<vmem>>, vector<8x6xf32>
    %c0_1 = arith.constant 0 : index
    %c0_2 = arith.constant 0 : index
    %1 = vector.load %arg2[%c0_1, %c0_2] : memref<6x128xf32, #tpu.memory_space<vmem>>, vector<6x128xf32>
    %cst = arith.constant dense<0.000000e+00> : vector<8x128xf32>
    %2 = tpu.matmul %0, %1, %cst {dimension_numbers = #tpu.dot_dimension_numbers<[1], [0], [0], [1], [0, 0, 1, 1], [], []>} : vector<8x6xf32>, vector<6x128xf32>, vector<8x128xf32> -> vector<8x128xf32>
    %c0_3 = arith.constant 0 : index
    %c0_4 = arith.constant 0 : index
    %3 = vector.load %arg3[%c0_3, %c0_4] : memref<1x128xf32, #tpu.memory_space<vmem>>, vector<1x128xf32>
    %4 = vector.broadcast %3 : vector<1x128xf32> to vector<8x128xf32>
    %5 = arith.addf %2, %4 : vector<8x128xf32>
    %cst_5 = arith.constant 0.000000e+00 : f32
    %6 = vector.broadcast %cst_5 : f32 to vector<8x128xf32>
    %7 = arith.maximumf %5, %6 : vector<8x128xf32>
    %c0_6 = arith.constant 0 : index
    %c0_7 = arith.constant 0 : index
    %8 = vector.load %arg4[%c0_6, %c0_7] : memref<128x32xf32, #tpu.memory_space<vmem>>, vector<128x32xf32>
    %cst_8 = arith.constant dense<0.000000e+00> : vector<8x32xf32>
    %9 = tpu.matmul %7, %8, %cst_8 {dimension_numbers = #tpu.dot_dimension_numbers<[1], [0], [0], [1], [0, 0, 1, 1], [], []>} : vector<8x128xf32>, vector<128x32xf32>, vector<8x32xf32> -> vector<8x32xf32>
    %c0_9 = arith.constant 0 : index
    %c0_10 = arith.constant 0 : index
    %10 = vector.load %arg5[%c0_9, %c0_10] : memref<1x32xf32, #tpu.memory_space<vmem>>, vector<1x32xf32>
    %11 = vector.broadcast %10 : vector<1x32xf32> to vector<8x32xf32>
    %12 = arith.addf %9, %11 : vector<8x32xf32>
    %cst_11 = arith.constant 0.000000e+00 : f32
    %13 = vector.broadcast %cst_11 : f32 to vector<8x32xf32>
    %14 = arith.maximumf %12, %13 : vector<8x32xf32>
    %15 = tpu.transpose %14, [1, 0] : vector<8x32xf32> -> vector<32x8xf32>
    %c0_12 = arith.constant 0 : index
    %c0_13 = arith.constant 0 : index
    %16 = vector.load %arg6[%c0_12, %c0_13] : memref<1x32xf32, #tpu.memory_space<vmem>>, vector<1x32xf32>
    %cst_14 = arith.constant dense<0.000000e+00> : vector<1x8xf32>
    %17 = tpu.matmul %16, %15, %cst_14 {dimension_numbers = #tpu.dot_dimension_numbers<[1], [0], [0], [1], [0, 0, 1, 1], [], []>} : vector<1x32xf32>, vector<32x8xf32>, vector<1x8xf32> -> vector<1x8xf32>
    %c0_15 = arith.constant 0 : index
    %c0_16 = arith.constant 0 : index
    %18 = vector.load %arg7[%c0_15, %c0_16] : memref<1x1xf32, #tpu.memory_space<vmem>>, vector<1x1xf32>
    %19 = vector.broadcast %18 : vector<1x1xf32> to vector<1x8xf32>
    %20 = arith.addf %17, %19 : vector<1x8xf32>
    %cst_17 = arith.constant 0.000000e+00 : f32
    %21 = vector.broadcast %cst_17 : f32 to vector<1x8xf32>
    %22 = arith.maximumf %20, %21 : vector<1x8xf32>
    %23 = math.absf %20 : vector<1x8xf32>
    %cst_18 = arith.constant 0.000000e+00 : f32
    %24 = vector.broadcast %cst_18 : f32 to vector<1x8xf32>
    %25 = arith.subf %24, %23 : vector<1x8xf32>
    %26 = math.exp %25 : vector<1x8xf32>
    %27 = math.log1p %26 : vector<1x8xf32>
    %28 = arith.addf %22, %27 : vector<1x8xf32>
    %29 = tpu.iota {dimensions = array<i32: 0>} : vector<2x8xi32>
    %c0_i32 = arith.constant 0 : i32
    %30 = vector.broadcast %c0_i32 : i32 to vector<2x8xi32>
    %31 = arith.cmpi eq, %29, %30 : vector<2x8xi32>
    %cst_19 = arith.constant 0.000000e+00 : f32
    %32 = vector.broadcast %cst_19 : f32 to vector<1x8xf32>
    %33 = arith.subf %32, %28 : vector<1x8xf32>
    %34 = arith.subf %20, %28 : vector<1x8xf32>
    %35 = vector.shape_cast %33 : vector<1x8xf32> to vector<1x8xf32>
    %36 = vector.broadcast %35 : vector<1x8xf32> to vector<2x8xf32>
    %37 = vector.shape_cast %34 : vector<1x8xf32> to vector<1x8xf32>
    %38 = vector.broadcast %37 : vector<1x8xf32> to vector<2x8xf32>
    %39 = arith.select %31, %36, %38 : vector<2x8xi1>, vector<2x8xf32>
    %c0_20 = arith.constant 0 : index
    %c0_21 = arith.constant 0 : index
    %40 = vector.load %arg8[%c0_20, %c0_21] : memref<2x8xf32, #tpu.memory_space<vmem>>, vector<2x8xf32>
    tpu.vector_store %arg8[%c0_20, %c0_21], %39 {strides = array<i32>} : memref<2x8xf32, #tpu.memory_space<vmem>>, vector<2x8xf32>,
    return
  }
  func.func @transform_0(%arg0: i32) -> (i32, i32) {
    %c0_i32 = arith.constant 0 : i32
    %c0_i32_0 = arith.constant 0 : i32
    return %arg0, %c0_i32 : i32, i32
  }
  func.func @transform_1(%arg0: i32) -> (i32, i32) {
    %c0_i32 = arith.constant 0 : i32
    %c0_i32_0 = arith.constant 0 : i32
    %c0_i32_1 = arith.constant 0 : i32
    return %c0_i32, %c0_i32_0 : i32, i32
  }
  func.func @transform_2(%arg0: i32) -> (i32, i32) {
    %c0_i32 = arith.constant 0 : i32
    %c0_i32_0 = arith.constant 0 : i32
    %c0_i32_1 = arith.constant 0 : i32
    return %c0_i32, %c0_i32_0 : i32, i32
  }
  func.func @transform_3(%arg0: i32) -> (i32, i32) {
    %c0_i32 = arith.constant 0 : i32
    %c0_i32_0 = arith.constant 0 : i32
    %c0_i32_1 = arith.constant 0 : i32
    return %c0_i32, %c0_i32_0 : i32, i32
  }
  func.func @transform_4(%arg0: i32) -> (i32, i32) {
    %c0_i32 = arith.constant 0 : i32
    %c0_i32_0 = arith.constant 0 : i32
    %c0_i32_1 = arith.constant 0 : i32
    return %c0_i32, %c0_i32_0 : i32, i32
  }
  func.func @transform_5(%arg0: i32) -> (i32, i32) {
    %c0_i32 = arith.constant 0 : i32
    %c0_i32_0 = arith.constant 0 : i32
    %c0_i32_1 = arith.constant 0 : i32
    return %c0_i32, %c0_i32_0 : i32, i32
  }
  func.func @transform_6(%arg0: i32) -> (i32, i32) {
    %c0_i32 = arith.constant 0 : i32
    %c0_i32_0 = arith.constant 0 : i32
    %c0_i32_1 = arith.constant 0 : i32
    return %c0_i32, %c0_i32_0 : i32, i32
  }
  func.func @transform_7(%arg0: i32) -> (i32, i32) {
    %c0_i32 = arith.constant 0 : i32
    %c0_i32_0 = arith.constant 0 : i32
    return %c0_i32, %arg0 : i32, i32
  }
}

</mosaic_0001>

<llo_original>
// kernel: tpu_custom_call.1
$region0: #{tpu_custom_call.1}
  #allocation0 [shape = 'u32[]', space=smem, size = 0x4, offset = 0x4, fixed_abs, tag = 'smem constant byte address 0x4 - core index']
  #allocation1 [shape = 'u32[144,128]{1,0:T(1,128)}', space=vmem, size = 0x12000, scoped, tag = 'internal scratch']
  #allocation2 [shape = 'f32[1,1]{1,0:T(1,128)S(1)}', space=vmem, size = 0x200, scoped, tag = 'scoped memory for tpu_custom_call.1']
  %s0 = inlined_call_operand.vmem [shape: f32[8,6], index: 0, kind: input, shape index: {}]
  %s1 = inlined_call_operand.vmem [shape: f32[6,128], index: 1, kind: input, shape index: {}]
  %s2 = inlined_call_operand.vmem [shape: f32[1,128], index: 2, kind: input, shape index: {}]
  %s3 = inlined_call_operand.vmem [shape: f32[128,32], index: 3, kind: input, shape index: {}]
  %s4 = inlined_call_operand.vmem [shape: f32[1,32], index: 4, kind: input, shape index: {}]
  %s5 = inlined_call_operand.vmem [shape: f32[1,32], index: 5, kind: input, shape index: {}]
  %s6 = inlined_call_operand.<no memory space> [shape: f32[1,1], index: 6, kind: input, shape index: {}]
  %s7 = inlined_call_operand.hbm [shape: f32[2,8], index: 7, kind: output, shape index: {}]
  %s8 = sld [smem:[#allocation0]]
  $region38: #{tpu_custom_call.1} parent=0
    _
  %s10 = ssub.s32 1, %s8
  %s11 = scalar_select 0, %s10, %s8
  %v12 = vstv %s6
  %13 = vst [vmem:[#allocation2] sm:$0x1] %v12
  $region1: #{tpu_custom_call.1} parent=0
    #allocation3 [shape = 'u8[1024]{0}', space=vmem, size = 0x400, scoped, tag = 'output window, operand 0, single buffered']
    #allocation4 [shape = 's32[1]{0}', space=sflag, size = 0x4, scoped, tag = 'scoped memory for tpu_custom_call.1']
    %14 = vsyncpa [#allocation4], 0
    // Predicated region
    $region2: #{tpu_custom_call.1} parent=1 // pred_check
      _
    $region3: #{tpu_custom_call.1} parent=1 // pred_check_branch
      %16 = sbr.rel (0) target = $region5
    $region4: #{tpu_custom_call.1} parent=1 // pred_region
      _
    $region5: #{tpu_custom_call.1} parent=1 // pred_fallthru
      _
    // Predicated region
    $region6: #{tpu_custom_call.1} parent=1 // pred_check
      _
    $region7: #{tpu_custom_call.1} parent=1 // pred_check_branch
      %18 = sbr.rel (0) target = $region9
    $region8: #{tpu_custom_call.1} parent=1 // pred_region
      _
    $region9: #{tpu_custom_call.1} parent=1 // pred_fallthru
      _
    // Predicated region
    $region10: #{tpu_custom_call.1} parent=1 // pred_check
      _
    $region11: #{tpu_custom_call.1} parent=1 // pred_check_branch
      %20 = sbr.rel (0) target = $region13
    $region12: #{tpu_custom_call.1} parent=1 // pred_region
      _
    $region13: #{tpu_custom_call.1} parent=1 // pred_fallthru
      _
    // Predicated region
    $region14: #{tpu_custom_call.1} parent=1 // pred_check
      _
    $region15: #{tpu_custom_call.1} parent=1 // pred_check_branch
      %22 = sbr.rel (0) target = $region17
    $region16: #{tpu_custom_call.1} parent=1 // pred_region
      _
    $region17: #{tpu_custom_call.1} parent=1 // pred_fallthru
      _
    // Predicated region
    $region18: #{tpu_custom_call.1} parent=1 // pred_check
      _
    $region19: #{tpu_custom_call.1} parent=1 // pred_check_branch
      %24 = sbr.rel (0) target = $region21
    $region20: #{tpu_custom_call.1} parent=1 // pred_region
      _
    $region21: #{tpu_custom_call.1} parent=1 // pred_fallthru
      _
    // Predicated region
    $region22: #{tpu_custom_call.1} parent=1 // pred_check
      _
    $region23: #{tpu_custom_call.1} parent=1 // pred_check_branch
      %26 = sbr.rel (0) target = $region25
    $region24: #{tpu_custom_call.1} parent=1 // pred_region
      _
    $region25: #{tpu_custom_call.1} parent=1 // pred_fallthru
      _
    // Predicated region
    $region26: #{tpu_custom_call.1} parent=1 // pred_check
      _
    $region27: #{tpu_custom_call.1} parent=1 // pred_check_branch
      %28 = sbr.rel (0) target = $region29
    $region28: #{tpu_custom_call.1} parent=1 // pred_region
      _
    $region29: #{tpu_custom_call.1} parent=1 // pred_fallthru
      _
    %v29 = vld [vmem:[%s0] sm:$0xff]
    %v30 = vld [vmem:[%s1] sm:$0x3f]
    %v31 = vld [vmem:[%s2] sm:$0x1]
    %v33 = vlaneseq
    %v34 = vshrl.u32 %v33, 7
    %v35 = vsub.s32 0, %v34
    %v36 = vrot.slane %v31, %v35
    %vm38 = vcmask 48128
    %v40 = vsel %vm38, %v29, 0
    %vm42 = vcmask 1045504
    %v44 = vsel %vm42, %v30, 0
    %46 = vmatprep.subr.mxu0 0.0
    %47 = vmatpush1.msra.mxu0 0.0
    %48 = vmatprep.subr.mxu0 0.0
    %49 = vmatpush1.msra.mxu0 0.0
    %50 = vmatprep.subr.mxu0 0.0
    %51 = vmatpush1.msra.mxu0 0.0
    %52 = vmatprep.subr.mxu0 0.0
    %53 = vmatpush1.msra.mxu0 0.0
    %54 = vmatprep.subr.mxu0 0.0
    %55 = vmatpush1.msra.mxu0 0.0
    %56 = vmatprep.subr.mxu0 0.0
    %57 = vmatpush1.msra.mxu0 0.0
    %58 = vmatprep.subr.mxu0 0.0
    %59 = vmatpush1.msra.mxu0 0.0
    %60 = vmatprep.subr.mxu0 0.0
    %61 = vmatpush1.msra.mxu0 0.0
    %62 = vmatprep.subr.mxu0 0.0
    %63 = vmatpush1.msra.mxu0 0.0
    %64 = vmatprep.subr.mxu0 0.0
    %65 = vmatpush1.msra.mxu0 0.0
    %66 = vmatprep.subr.mxu0 0.0
    %67 = vmatpush1.msra.mxu0 0.0
    %68 = vmatprep.subr.mxu0 0.0
    %69 = vmatpush1.msra.mxu0 0.0
    %70 = vmatprep.subr.mxu0 0.0
    %71 = vmatpush1.msra.mxu0 0.0
    %72 = vmatprep.subr.mxu0 0.0
    %73 = vmatpush1.msra.mxu0 0.0
    %74 = vmatprep.subr.mxu0 0.0
    %75 = vmatpush1.msra.mxu0 0.0
    %76 = vmatprep.subr.mxu0 0.0
    %77 = vmatpush1.msra.mxu0 %v44
    %78 = vmatprep.subr.mxu0 0.0
    %79 = vmatpush2.msra.mxu0 0.0
    %80 = vmatprep.subr.mxu0 0.0
    %81 = vmatpush2.msra.mxu0 0.0
    %82 = vmatprep.subr.mxu0 0.0
    %83 = vmatpush2.msra.mxu0 0.0
    %84 = vmatprep.subr.mxu0 0.0
    %85 = vmatpush2.msra.mxu0 0.0
    %86 = vmatprep.subr.mxu0 0.0
    %87 = vmatpush2.msra.mxu0 0.0
    %88 = vmatprep.subr.mxu0 0.0
    %89 = vmatpush2.msra.mxu0 0.0
    %90 = vmatprep.subr.mxu0 0.0
    %91 = vmatpush2.msra.mxu0 0.0
    %92 = vmatprep.subr.mxu0 0.0
    %93 = vmatpush2.msra.mxu0 0.0
    %94 = vmatprep.subr.mxu0 0.0
    %95 = vmatpush2.msra.mxu0 0.0
    %96 = vmatprep.subr.mxu0 0.0
    %97 = vmatpush2.msra.mxu0 0.0
    %98 = vmatprep.subr.mxu0 0.0
    %99 = vmatpush2.msra.mxu0 0.0
    %100 = vmatprep.subr.mxu0 0.0
    %101 = vmatpush2.msra.mxu0 0.0
    %102 = vmatprep.subr.mxu0 0.0
    %103 = vmatpush2.msra.mxu0 0.0
    %104 = vmatprep.subr.mxu0 0.0
    %105 = vmatpush2.msra.mxu0 0.0
    %106 = vmatprep.subr.mxu0 0.0
    %107 = vmatpush2.msra.mxu0 0.0
    %108 = vmatprep.subr.mxu0 0.0
    %109 = vmatpush2.msra.mxu0 0.0
    %110 = vmatprep.mubr.f32.mxu0 0.0
    %111 = vmatmul.mubr.f32.gmra.mxu0 %v40
    %v112 = vpop.f32.mrf.mxu0
    %v113 = vadd.f32 %v36, %v112
    %v114 = vpop.f32.mrf.mxu0
    %115 = vdwg.mxu0
    %v116 = vmax.f32 %v113, 0.0
    %v117 = vld [vmem:[%s3] sm:$0xff]
    %v118 = vld [vmem:[%s3 + $0x8] sm:$0xff]
    %v119 = vld [vmem:[%s3 + $0x10] sm:$0xff]
    %v120 = vld [vmem:[%s3 + $0x18] sm:$0xff]
    %v121 = vld [vmem:[%s3 + $0x20] sm:$0xff]
    %v122 = vld [vmem:[%s3 + $0x28] sm:$0xff]
    %v123 = vld [vmem:[%s3 + $0x30] sm:$0xff]
    %v124 = vld [vmem:[%s3 + $0x38] sm:$0xff]
    %v125 = vld [vmem:[%s3 + $0x40] sm:$0xff]
    %v126 = vld [vmem:[%s3 + $0x48] sm:$0xff]
    %v127 = vld [vmem:[%s3 + $0x50] sm:$0xff]
    %v128 = vld [vmem:[%s3 + $0x58] sm:$0xff]
    %v129 = vld [vmem:[%s3 + $0x60] sm:$0xff]
    %v130 = vld [vmem:[%s3 + $0x68] sm:$0xff]
    %v131 = vld [vmem:[%s3 + $0x70] sm:$0xff]
    %v132 = vld [vmem:[%s3 + $0x78] sm:$0xff]
    %v133 = vld [vmem:[%s4] sm:$0x1]
    %v135 = vlaneseq
    %v136 = vshrl.u32 %v135, 7
    %v137 = vsub.s32 0, %v136
    %v138 = vrot.slane %v133, %v137
    %140 = vmatprep.subr.mxu0 0.0
    %141 = vmatpush1.msra.mxu0 %v132
    %142 = vmatprep.subr.mxu0 0.0
    %143 = vmatpush1.msra.mxu0 %v131
    %144 = vmatprep.subr.mxu0 0.0
    %145 = vmatpush1.msra.mxu0 %v130
    %146 = vmatprep.subr.mxu0 0.0
    %147 = vmatpush1.msra.mxu0 %v129
    %148 = vmatprep.subr.mxu0 0.0
    %149 = vmatpush1.msra.mxu0 %v128
    %150 = vmatprep.subr.mxu0 0.0
    %151 = vmatpush1.msra.mxu0 %v127
    %152 = vmatprep.subr.mxu0 0.0
    %153 = vmatpush1.msra.mxu0 %v126
    %154 = vmatprep.subr.mxu0 0.0
    %155 = vmatpush1.msra.mxu0 %v125
    %156 = vmatprep.subr.mxu0 0.0
    %157 = vmatpush1.msra.mxu0 %v124
    %158 = vmatprep.subr.mxu0 0.0
    %159 = vmatpush1.msra.mxu0 %v123
    %160 = vmatprep.subr.mxu0 0.0
    %161 = vmatpush1.msra.mxu0 %v122
    %162 = vmatprep.subr.mxu0 0.0
    %163 = vmatpush1.msra.mxu0 %v121
    %164 = vmatprep.subr.mxu0 0.0
    %165 = vmatpush1.msra.mxu0 %v120
    %166 = vmatprep.subr.mxu0 0.0
    %167 = vmatpush1.msra.mxu0 %v119
    %168 = vmatprep.subr.mxu0 0.0
    %169 = vmatpush1.msra.mxu0 %v118
    %170 = vmatprep.subr.mxu0 0.0
    %171 = vmatpush1.msra.mxu0 %v117
    %172 = vmatprep.subr.mxu0 0.0
    %173 = vmatpush2.msra.mxu0 0.0
    %174 = vmatprep.subr.mxu0 0.0
    %175 = vmatpush2.msra.mxu0 0.0
    %176 = vmatprep.subr.mxu0 0.0
    %177 = vmatpush2.msra.mxu0 0.0
    %178 = vmatprep.subr.mxu0 0.0
    %179 = vmatpush2.msra.mxu0 0.0
    %180 = vmatprep.subr.mxu0 0.0
    %181 = vmatpush2.msra.mxu0 0.0
    %182 = vmatprep.subr.mxu0 0.0
    %183 = vmatpush2.msra.mxu0 0.0
    %184 = vmatprep.subr.mxu0 0.0
    %185 = vmatpush2.msra.mxu0 0.0
    %186 = vmatprep.subr.mxu0 0.0
    %187 = vmatpush2.msra.mxu0 0.0
    %188 = vmatprep.subr.mxu0 0.0
    %189 = vmatpush2.msra.mxu0 0.0
    %190 = vmatprep.subr.mxu0 0.0
    %191 = vmatpush2.msra.mxu0 0.0
    %192 = vmatprep.subr.mxu0 0.0
    %193 = vmatpush2.msra.mxu0 0.0
    %194 = vmatprep.subr.mxu0 0.0
    %195 = vmatpush2.msra.mxu0 0.0
    %196 = vmatprep.subr.mxu0 0.0
    %197 = vmatpush2.msra.mxu0 0.0
    %198 = vmatprep.subr.mxu0 0.0
    %199 = vmatpush2.msra.mxu0 0.0
    %200 = vmatprep.subr.mxu0 0.0
    %201 = vmatpush2.msra.mxu0 0.0
    %202 = vmatprep.subr.mxu0 0.0
    %203 = vmatpush2.msra.mxu0 0.0
    %204 = vmatprep.mubr.f32.mxu0 0.0
    %205 = vmatmul.mubr.f32.gmra.mxu0 %v116
    %v206 = vpop.f32.mrf.mxu0
    %v207 = vadd.f32 %v138, %v206
    %v208 = vpop.f32.mrf.mxu0
    %209 = vdwg.mxu0
    %v210 = vmax.f32 %v207, 0.0
    %v211 = vld [vmem:[%s5] sm:$0x1]
    %v212 = vld [vmem:[#allocation2] sm:$0x1]
    %214 = vset.pattern.permute.xlu0 0
    %215 = vperm.xlu0 %214, %v212
    %v216 = vpop.permute.xlu0 %215
    %v218 = vlaneseq
    %v219 = vshrl.u32 %v218, 7
    %v220 = vsub.s32 0, %v219
    %v221 = vrot.slane %v216, %v220
    %vm222 = vcmask 261120
    %v224 = vsel %vm222, %v211, 0
    %v227 = vsel %vm222, %v210, 0
    %229 = vmatprep.subr.mxu0 0.0
    %230 = vmatpush1.xpose.msra.mxu0 0.0
    %231 = vmatprep.subr.mxu0 0.0
    %232 = vmatpush1.xpose.msra.mxu0 0.0
    %233 = vmatprep.subr.mxu0 0.0
    %234 = vmatpush1.xpose.msra.mxu0 0.0
    %235 = vmatprep.subr.mxu0 0.0
    %236 = vmatpush1.xpose.msra.mxu0 0.0
    %237 = vmatprep.subr.mxu0 0.0
    %238 = vmatpush1.xpose.msra.mxu0 0.0
    %239 = vmatprep.subr.mxu0 0.0
    %240 = vmatpush1.xpose.msra.mxu0 0.0
    %241 = vmatprep.subr.mxu0 0.0
    %242 = vmatpush1.xpose.msra.mxu0 0.0
    %243 = vmatprep.subr.mxu0 0.0
    %244 = vmatpush1.xpose.msra.mxu0 0.0
    %245 = vmatprep.subr.mxu0 0.0
    %246 = vmatpush1.xpose.msra.mxu0 0.0
    %247 = vmatprep.subr.mxu0 0.0
    %248 = vmatpush1.xpose.msra.mxu0 0.0
    %249 = vmatprep.subr.mxu0 0.0
    %250 = vmatpush1.xpose.msra.mxu0 0.0
    %251 = vmatprep.subr.mxu0 0.0
    %252 = vmatpush1.xpose.msra.mxu0 0.0
    %253 = vmatprep.subr.mxu0 0.0
    %254 = vmatpush1.xpose.msra.mxu0 0.0
    %255 = vmatprep.subr.mxu0 0.0
    %256 = vmatpush1.xpose.msra.mxu0 0.0
    %257 = vmatprep.subr.mxu0 0.0
    %258 = vmatpush1.xpose.msra.mxu0 0.0
    %259 = vmatprep.subr.mxu0 0.0
    %260 = vmatpush1.xpose.msra.mxu0 %v227
    %261 = vmatprep.subr.mxu0 0.0
    %262 = vmatpush2.xpose.msra.mxu0 0.0
    %263 = vmatprep.subr.mxu0 0.0
    %264 = vmatpush2.xpose.msra.mxu0 0.0
    %265 = vmatprep.subr.mxu0 0.0
    %266 = vmatpush2.xpose.msra.mxu0 0.0
    %267 = vmatprep.subr.mxu0 0.0
    %268 = vmatpush2.xpose.msra.mxu0 0.0
    %269 = vmatprep.subr.mxu0 0.0
    %270 = vmatpush2.xpose.msra.mxu0 0.0
    %271 = vmatprep.subr.mxu0 0.0
    %272 = vmatpush2.xpose.msra.mxu0 0.0
    %273 = vmatprep.subr.mxu0 0.0
    %274 = vmatpush2.xpose.msra.mxu0 0.0
    %275 = vmatprep.subr.mxu0 0.0
    %276 = vmatpush2.xpose.msra.mxu0 0.0
    %277 = vmatprep.subr.mxu0 0.0
    %278 = vmatpush2.xpose.msra.mxu0 0.0
    %279 = vmatprep.subr.mxu0 0.0
    %280 = vmatpush2.xpose.msra.mxu0 0.0
    %281 = vmatprep.subr.mxu0 0.0
    %282 = vmatpush2.xpose.msra.mxu0 0.0
    %283 = vmatprep.subr.mxu0 0.0
    %284 = vmatpush2.xpose.msra.mxu0 0.0
    %285 = vmatprep.subr.mxu0 0.0
    %286 = vmatpush2.xpose.msra.mxu0 0.0
    %287 = vmatprep.subr.mxu0 0.0
    %288 = vmatpush2.xpose.msra.mxu0 0.0
    %289 = vmatprep.subr.mxu0 0.0
    %290 = vmatpush2.xpose.msra.mxu0 0.0
    %291 = vmatprep.subr.mxu0 0.0
    %292 = vmatpush2.xpose.msra.mxu0 0.0
    %293 = vmatprep.mubr.f32.mxu0 0.0
    %294 = vmatmul.mubr.f32.gmra.mxu0 %v224
    %v295 = vpop.f32.mrf.mxu0
    %v296 = vadd.f32 %v221, %v295
    %v297 = vpop.f32.mrf.mxu0
    %298 = vdwg.mxu0
    %v299 = vmax.f32 %v296, 0.0
    %v300 = vand.u32 2147483647, %v296
    %v301 = vsub.f32 0.0, %v300
    %v302 = vmul.f32 %v301, 1.442695
    %v303 = vpow.pop %v302
    %v304 = vadd.f32 %v303, 1.0
    %v305 = vlog2.pop %v304
    %v306 = vmul.f32 %v305, 0.6931472
    %v307 = vmul.f32 -0.5, %v303
    %v308 = vadd.f32 %v307, 1.0
    %v309 = vmul.f32 %v308, %v303
    %v310 = vand.u32 2147483647, %v303
    %vm311 = vcmp.lt.f32.partialorder %v310, 0.0004427343
    %v312 = vsel %vm311, %v309, %v306
    %v313 = vadd.f32 %v299, %v312
    %v314 = vlaneseq
    %v315 = vshrl.u32 %v314, 7
    %vm316 = vcmp.eq.s32.totalorder %v315, 0
    %v317 = vsub.f32 0.0, %v313
    %v318 = vsub.f32 %v296, %v313
    %v319 = vlaneseq
    %v320 = vshrl.u32 %v319, 7
    %v321 = vsub.s32 0, %v320
    %v322 = vrot.slane %v317, %v321
    %v323 = vlaneseq
    %v324 = vshrl.u32 %v323, 7
    %v325 = vsub.s32 0, %v324
    %v326 = vrot.slane %v318, %v325
    %v327 = vsel %vm316, %v322, %v326
    %vm328 = vcmask 58368
    %329 = vst.msk [vmem:[#allocation3] sm:$0x3] %vm328, %v327
    // Predicated region
    $region30: #{tpu_custom_call.1} parent=1 // pred_check
      _
    $region31: #{tpu_custom_call.1} parent=1 // pred_check_branch
      %331 = sbr.rel (0) target = $region33
    $region32: #{tpu_custom_call.1} parent=1 // pred_region
      %s333 = ssub.s32 32, 32
      %334 = vsyncadd [#allocation4], %s333
      %s336 = sshll.u32 [#allocation3], 4
      %s337 = int_to_ptr.vmem [resolvable:$true] %s336
      %339 = dma.vmem_to_hbm [thread:$0]  %s337, 32, %s7, [#allocation4]
    $region33: #{tpu_custom_call.1} parent=1 // pred_fallthru
      _
    // Predicated region
    $region34: #{tpu_custom_call.1} parent=1 // pred_check
      _
    $region35: #{tpu_custom_call.1} parent=1 // pred_check_branch
      %341 = sbr.rel (0) target = $region37
    $region36: #{tpu_custom_call.1} parent=1 // pred_region
      %342 = dma.done [#allocation4], 32
    $region37: #{tpu_custom_call.1} parent=1 // pred_fallthru
      _
    %343 = vsyncpa [#allocation4], 1

</llo_original>
